<compile_context>
chip_gen: v5e
topology: v5e:2x2
jax: 0.10.0
libtpu: 0.0.40
codegen_flags: <defaults>
</compile_context>

<pallas_src>
import jax
import jax.numpy as jnp
from jax.experimental import pallas as pl
from jax.experimental.pallas import tpu as pltpu


def _round_up(n, m):
    return ((n + m - 1) // m) * m


def _hl_loop_kernel(x_ref, w_ref, p_ref, out_ref):
    """Fused Linear + LeakyReLU(0.2) + BatchNorm1d(train) for one feature tile.

    x_ref   : (B, I)   input activations (resident across the whole grid)
    w_ref   : (I, TN)  linear weight tile (already transposed vs. PyTorch)
    p_ref   : (3, TN)  packed [bias; gamma; beta], f32
    out_ref : (B, TN)  batch-normalized activations for this feature tile
    """
    # Native-dtype operands straight into the MXU; accumulate in f32.
    y = jnp.dot(x_ref[...], w_ref[...], preferred_element_type=jnp.float32)
    y = y + p_ref[0:1, :]                      # bias (f32)

    # LeakyReLU(0.2) on the VPU.
    y = jnp.where(y > 0, y, 0.2 * y)

    # BatchNorm1d training-mode stats (biased variance), single pass over y:
    # var = E[y^2] - mean^2, clamped against tiny negative fp error.
    mean = jnp.mean(y, axis=0, keepdims=True)
    mean_sq = jnp.mean(y * y, axis=0, keepdims=True)
    var = jnp.maximum(mean_sq - mean * mean, 0.0)
    inv_std = jax.lax.rsqrt(var + 1e-5)        # EUP path (otherwise idle)

    # Fold BN affine into per-feature scale/shift (cheap (1,TN) row math) so
    # the per-element work collapses to one FMA.
    scale = inv_std * p_ref[1:2, :]            # gamma / std
    shift = p_ref[2:3, :] - mean * scale       # beta - mean * gamma / std
    l3 = y * scale + shift

    out_ref[...] = l3.astype(out_ref.dtype)


def hl_loop_forward(x, weight, bias, gamma, beta):
    """x: (B, I); weight: (O, I) PyTorch layout; bias/gamma/beta: (O,).

    Returns concat([batchnorm(leaky_relu(x @ W.T + b)), x], axis=1),
    i.e. hl_loop.forward with _is_discriminator=False (no dropout).
    """
    B, I = x.shape
    O = weight.shape[0]

    # Lane-dense feature tiling: pad O up to a multiple of 128; use 512-wide
    # tiles once the padded width exceeds 512 (roofline guidance) while
    # staying well inside v7x's 64 MiB VMEM with double buffering.
    o_lane = _round_up(O, 128)
    tn = o_lane if o_lane <= 512 else 512
    o_pad = _round_up(O, tn)
    grid = (o_pad // tn,)

    # Weight transposed + zero-padded along the feature axis (padded features
    # produce exact zeros through linear/leaky/BN, then get sliced off).
    w_t = jnp.zeros((I, o_pad), dtype=weight.dtype).at[:, :O].set(weight.T)

    # Packed params -> a single DMA descriptor instead of three (1,O) blocks.
    params = jnp.zeros((3, o_pad), dtype=jnp.float32)
    params = params.at[0, :O].set(bias.astype(jnp.float32))
    params = params.at[1, :O].set(gamma.astype(jnp.float32))
    params = params.at[2, :O].set(beta.astype(jnp.float32))

    cost = pl.CostEstimate(
        flops=2 * B * I * o_pad,
        transcendentals=o_pad,
        bytes_accessed=4 * (B * I + I * o_pad + 3 * o_pad + B * o_pad),
    )

    bn_out = pl.pallas_call(
        _hl_loop_kernel,
        out_shape=jax.ShapeDtypeStruct((B, o_pad), x.dtype),
        grid=grid,
        in_specs=[
            pl.BlockSpec((B, I), lambda j: (0, 0)),    # x: resident across grid
            pl.BlockSpec((I, tn), lambda j: (0, j)),   # weight: streams per tile
            pl.BlockSpec((3, tn), lambda j: (0, j)),   # packed bias/gamma/beta
        ],
        out_specs=pl.BlockSpec((B, tn), lambda j: (0, j)),
        compiler_params=pltpu.CompilerParams(
            dimension_semantics=("parallel",)),        # megacore-shardable
        cost_estimate=cost,
    )(x, w_t, params)

    # The x passthrough is a pure memcpy: let XLA do the slice + concat instead
    # of burning vector-store slots and doubling x's HBM traffic in-kernel.
    return jnp.concatenate([bn_out[:, :O], x], axis=1)


def _reference(x, weight, bias, gamma, beta):
    """Pure-JAX reference mirroring the PyTorch forward (training-mode BN)."""
    y = x @ weight.T + bias
    y = jnp.where(y > 0, y, 0.2 * y)
    mean = jnp.mean(y, axis=0, keepdims=True)
    var = jnp.mean((y - mean) ** 2, axis=0, keepdims=True)
    l3 = (y - mean) / jnp.sqrt(var + 1e-5) * gamma + beta
    return jnp.concatenate([l3, x], axis=1)


if __name__ == "__main__":
    # Small shapes consistent with the module's (batch, features) forward.
    B, I, O = 8, 32, 64
    key = jax.random.PRNGKey(0)
    kx, kw, kb = jax.random.split(key, 3)

    x = jax.random.normal(kx, (B, I), dtype=jnp.float32)

    # Deterministic parameter init (PyTorch Linear-style uniform bound).
    bound = 1.0 / (I ** 0.5)
    weight = jax.random.uniform(kw, (O, I), minval=-bound, maxval=bound,
                                dtype=jnp.float32)
    bias = jax.random.uniform(kb, (O,), minval=-bound, maxval=bound,
                              dtype=jnp.float32)
    gamma = jnp.ones((O,), dtype=jnp.float32)   # BatchNorm1d default affine init
    beta = jnp.zeros((O,), dtype=jnp.float32)

    fwd = jax.jit(hl_loop_forward)
    out = fwd(x, weight, bias, gamma, beta)
    out = jax.block_until_ready(out)

    ref = _reference(x, weight, bias, gamma, beta)
    assert out.shape == (B, O + I)
    assert jnp.allclose(out, ref, atol=1e-4, rtol=1e-4)

    print("KERNEL_OK")
</pallas_src>

<mosaic_0001>
module attributes {stable_mosaic.version = 11 : i64} {
  func.func @_hl_loop_kernel(%arg0: i32, %arg1: memref<8x32xf32, #tpu.memory_space<vmem>>, %arg2: memref<32x128xf32, #tpu.memory_space<vmem>>, %arg3: memref<3x128xf32, #tpu.memory_space<vmem>>, %arg4: memref<8x128xf32, #tpu.memory_space<vmem>>) attributes {dimension_semantics = [#tpu.dimension_semantics<parallel>], iteration_bounds = array<i64: 1>, scalar_prefetch = 0 : i64, scratch_operands = 0 : i64, tpu.core_type = #tpu.core_type<tc>, window_params = [{pipeline_mode = #tpu.pipeline_mode<synchronous>, transform_indices = @transform_0, window_bounds = array<i64: 8, 32>}, {transform_indices = @transform_1, window_bounds = array<i64: 32, 128>}, {transform_indices = @transform_2, window_bounds = array<i64: 3, 128>}, {transform_indices = @transform_3, window_bounds = array<i64: 8, 128>}]} {
    %c0 = arith.constant 0 : index
    %c0_0 = arith.constant 0 : index
    %0 = vector.load %arg1[%c0, %c0_0] : memref<8x32xf32, #tpu.memory_space<vmem>>, vector<8x32xf32>
    %c0_1 = arith.constant 0 : index
    %c0_2 = arith.constant 0 : index
    %1 = vector.load %arg2[%c0_1, %c0_2] : memref<32x128xf32, #tpu.memory_space<vmem>>, vector<32x128xf32>
    %cst = arith.constant dense<0.000000e+00> : vector<8x128xf32>
    %2 = tpu.matmul %0, %1, %cst {dimension_numbers = #tpu.dot_dimension_numbers<[1], [0], [0], [1], [0, 0, 1, 1], [], []>} : vector<8x32xf32>, vector<32x128xf32>, vector<8x128xf32> -> vector<8x128xf32>
    %c0_3 = arith.constant 0 : index
    %c0_4 = arith.constant 0 : index
    %3 = vector.load %arg3[%c0_3, %c0_4] : memref<3x128xf32, #tpu.memory_space<vmem>>, vector<1x128xf32>
    %4 = vector.broadcast %3 : vector<1x128xf32> to vector<8x128xf32>
    %5 = arith.addf %2, %4 : vector<8x128xf32>
    %cst_5 = arith.constant 0.000000e+00 : f32
    %6 = vector.broadcast %cst_5 : f32 to vector<8x128xf32>
    %7 = arith.cmpf ogt, %5, %6 : vector<8x128xf32>
    %cst_6 = arith.constant 2.000000e-01 : f32
    %8 = vector.broadcast %cst_6 : f32 to vector<8x128xf32>
    %9 = arith.mulf %8, %5 : vector<8x128xf32>
    %10 = arith.select %7, %5, %9 : vector<8x128xi1>, vector<8x128xf32>
    %cst_7 = arith.constant dense<0.000000e+00> : vector<128xf32>
    %11 = vector.multi_reduction <add>, %10, %cst_7 [0] : vector<8x128xf32> to vector<128xf32>
    %12 = vector.shape_cast %11 : vector<128xf32> to vector<1x128xf32>
    %cst_8 = arith.constant 8.000000e+00 : f32
    %13 = vector.broadcast %cst_8 : f32 to vector<1x128xf32>
    %14 = arith.divf %12, %13 : vector<1x128xf32>
    %15 = arith.mulf %10, %10 : vector<8x128xf32>
    %cst_9 = arith.constant dense<0.000000e+00> : vector<128xf32>
    %16 = vector.multi_reduction <add>, %15, %cst_9 [0] : vector<8x128xf32> to vector<128xf32>
    %17 = vector.shape_cast %16 : vector<128xf32> to vector<1x128xf32>
    %cst_10 = arith.constant 8.000000e+00 : f32
    %18 = vector.broadcast %cst_10 : f32 to vector<1x128xf32>
    %19 = arith.divf %17, %18 : vector<1x128xf32>
    %20 = arith.mulf %14, %14 : vector<1x128xf32>
    %21 = arith.subf %19, %20 : vector<1x128xf32>
    %cst_11 = arith.constant 0.000000e+00 : f32
    %22 = vector.broadcast %cst_11 : f32 to vector<1x128xf32>
    %23 = arith.maximumf %21, %22 : vector<1x128xf32>
    %cst_12 = arith.constant 9.99999974E-6 : f32
    %24 = vector.broadcast %cst_12 : f32 to vector<1x128xf32>
    %25 = arith.addf %23, %24 : vector<1x128xf32>
    %26 = math.rsqrt %25 : vector<1x128xf32>
    %c1 = arith.constant 1 : index
    %c0_13 = arith.constant 0 : index
    %27 = vector.load %arg3[%c1, %c0_13] : memref<3x128xf32, #tpu.memory_space<vmem>>, vector<1x128xf32>
    %28 = arith.mulf %26, %27 : vector<1x128xf32>
    %c2 = arith.constant 2 : index
    %c0_14 = arith.constant 0 : index
    %29 = vector.load %arg3[%c2, %c0_14] : memref<3x128xf32, #tpu.memory_space<vmem>>, vector<1x128xf32>
    %30 = arith.mulf %14, %28 : vector<1x128xf32>
    %31 = arith.subf %29, %30 : vector<1x128xf32>
    %32 = vector.broadcast %28 : vector<1x128xf32> to vector<8x128xf32>
    %33 = arith.mulf %10, %32 : vector<8x128xf32>
    %34 = vector.broadcast %31 : vector<1x128xf32> to vector<8x128xf32>
    %35 = arith.addf %33, %34 : vector<8x128xf32>
    %c0_15 = arith.constant 0 : index
    %c0_16 = arith.constant 0 : index
    %36 = vector.load %arg4[%c0_15, %c0_16] : memref<8x128xf32, #tpu.memory_space<vmem>>, vector<8x128xf32>
    tpu.vector_store %arg4[%c0_15, %c0_16], %35 {strides = array<i32>} : memref<8x128xf32, #tpu.memory_space<vmem>>, vector<8x128xf32>,
    return
  }
  func.func @transform_0(%arg0: i32) -> (i32, i32) {
    %c0_i32 = arith.constant 0 : i32
    %c0_i32_0 = arith.constant 0 : i32
    %c0_i32_1 = arith.constant 0 : i32
    return %c0_i32, %c0_i32_0 : i32, i32
  }
  func.func @transform_1(%arg0: i32) -> (i32, i32) {
    %c0_i32 = arith.constant 0 : i32
    %c0_i32_0 = arith.constant 0 : i32
    return %c0_i32, %arg0 : i32, i32
  }
  func.func @transform_2(%arg0: i32) -> (i32, i32) {
    %c0_i32 = arith.constant 0 : i32
    %c0_i32_0 = arith.constant 0 : i32
    return %c0_i32, %arg0 : i32, i32
  }
  func.func @transform_3(%arg0: i32) -> (i32, i32) {
    %c0_i32 = arith.constant 0 : i32
    %c0_i32_0 = arith.constant 0 : i32
    return %c0_i32, %arg0 : i32, i32
  }
}

</mosaic_0001>

<llo_original>
// kernel: hl_loop_forward.1
$region0: #{hl_loop_forward.1}
  #allocation0 [shape = 'u32[]', space=smem, size = 0x4, offset = 0x4, fixed_abs, tag = 'smem constant byte address 0x4 - core index']
  #allocation1 [shape = 'u32[72,128]{1,0:T(1,128)}', space=vmem, size = 0x9000, scoped, tag = 'internal scratch']
  %s0 = inlined_call_operand.vmem [shape: f32[8,32], index: 0, kind: input, shape index: {}]
  %s1 = inlined_call_operand.vmem [shape: f32[32,128], index: 1, kind: input, shape index: {}]
  %s2 = inlined_call_operand.vmem [shape: f32[3,128], index: 2, kind: input, shape index: {}]
  %s3 = inlined_call_operand.vmem [shape: f32[8,128], index: 3, kind: output, shape index: {}]
  %s4 = sld [smem:[#allocation0]]
  $region22: #{hl_loop_forward.1} parent=0
    _
  %s6 = ssub.s32 1, %s4
  %s7 = scalar_select 0, %s6, %s4
  // Predicated region
  $region2: #{hl_loop_forward.1} parent=0 // pred_check
    _
  $region3: #{hl_loop_forward.1} parent=0 // pred_check_branch
    %9 = sbr.rel (0) target = $region5
  $region4: #{hl_loop_forward.1} parent=0 // pred_region
    _
  $region5: #{hl_loop_forward.1} parent=0 // pred_fallthru
    _
  // Predicated region
  $region6: #{hl_loop_forward.1} parent=0 // pred_check
    _
  $region7: #{hl_loop_forward.1} parent=0 // pred_check_branch
    %11 = sbr.rel (0) target = $region9
  $region8: #{hl_loop_forward.1} parent=0 // pred_region
    _
  $region9: #{hl_loop_forward.1} parent=0 // pred_fallthru
    _
  // Predicated region
  $region10: #{hl_loop_forward.1} parent=0 // pred_check
    _
  $region11: #{hl_loop_forward.1} parent=0 // pred_check_branch
    %13 = sbr.rel (0) target = $region13
  $region12: #{hl_loop_forward.1} parent=0 // pred_region
    _
  $region13: #{hl_loop_forward.1} parent=0 // pred_fallthru
    _
  %v14 = vld [vmem:[%s0] sm:$0xff]
  %v15 = vld [vmem:[%s1] sm:$0xff]
  %v16 = vld [vmem:[%s1 + $0x8] sm:$0xff]
  %v17 = vld [vmem:[%s1 + $0x10] sm:$0xff]
  %v18 = vld [vmem:[%s1 + $0x18] sm:$0xff]
  %v19 = vld [vmem:[%s2] sm:$0x1]
  %v20 = vperm.slane %v19, 0
  %vm21 = vcmask 261120
  %v23 = vsel %vm21, %v14, 0
  %25 = vmatpush.msra.mxu0 0.0
  %26 = vmatpush.msra.mxu0 0.0
  %27 = vmatpush.msra.mxu0 0.0
  %28 = vmatpush.msra.mxu0 0.0
  %29 = vmatpush.msra.mxu0 0.0
  %30 = vmatpush.msra.mxu0 0.0
  %31 = vmatpush.msra.mxu0 0.0
  %32 = vmatpush.msra.mxu0 0.0
  %33 = vmatpush.msra.mxu0 0.0
  %34 = vmatpush.msra.mxu0 0.0
  %35 = vmatpush.msra.mxu0 0.0
  %36 = vmatpush.msra.mxu0 0.0
  %37 = vmatpush.msra.mxu0 %v18
  %38 = vmatpush.msra.mxu0 %v17
  %39 = vmatpush.msra.mxu0 %v16
  %40 = vmatpush.msra.mxu0 %v15
  %41 = vmatmul.f32.gmra.mxu0 %v23
  %v42 = vpop.f32.mrf.mxu0
  %v43 = vadd.f32 %v20, %v42
  %44 = vdwg.mxu0
  %vm45 = vcmp.gt.f32.partialorder %v43, 0.0
  %v46 = vmul.f32 %v43, 0.2
  %v47 = vsel %vm45, %v43, %v46
  %v48 = vrot.slane %v47, 4
  %v49 = vadd.f32 %v47, %v48
  %v50 = vrot.slane %v49, 2
  %v51 = vadd.f32 %v49, %v50
  %v52 = vrot.slane %v51, 1
  %v53 = vadd.f32 %v51, %v52
  %v54 = vrcp.pop 8.0
  %v55 = vmul.f32 8.0, %v54
  %v56 = vsub.f32 1.0, %v55
  %v57 = vmul.f32 %v54, %v56
  %v58 = vadd.f32 %v54, %v57
  %vm59 = vweird.f32 %v54
  %v60 = vsel %vm59, %v54, %v58
  %v61 = vmul.f32 %v53, %v60
  %v62 = vmul.f32 %v47, %v47
  %v63 = vrot.slane %v62, 4
  %v64 = vadd.f32 %v62, %v63
  %v65 = vrot.slane %v64, 2
  %v66 = vadd.f32 %v64, %v65
  %v67 = vrot.slane %v66, 1
  %v68 = vadd.f32 %v66, %v67
  %v69 = vmul.f32 %v68, %v60
  %v70 = vmul.f32 %v61, %v61
  %v71 = vsub.f32 %v69, %v70
  %v72 = vmax.f32 %v71, 0.0
  %v73 = vadd.f32 %v72, 1e-05
  %v74 = vrsqrt.pop %v73
  %v75 = vmul.f32 %v74, %v73
  %v76 = vmul.f32 %v75, %v74
  %v77 = vmul.f32 0.5, %v76
  %v78 = vsub.f32 1.5, %v77
  %v79 = vmul.f32 %v74, %v78
  %vm80 = vweird.f32 %v73
  %vm81 = vweird.f32 %v74
  %vm82 = vmor %vm80, %vm81
  %v83 = vsel %vm82, %v74, %v79
  %v84 = vld [vmem:[%s2 + $0x1] sm:$0x1]
  %v85 = vmul.f32 %v83, %v84
  %v86 = vld [vmem:[%s2 + $0x2] sm:$0x1]
  %v87 = vmul.f32 %v61, %v85
  %v88 = vsub.f32 %v86, %v87
  %v89 = vperm.slane %v85, 0
  %v90 = vmul.f32 %v47, %v89
  %v91 = vperm.slane %v88, 0
  %v92 = vadd.f32 %v90, %v91
  %93 = vst [vmem:[%s3] sm:$0xff] %v92
  // Predicated region
  $region14: #{hl_loop_forward.1} parent=0 // pred_check
    _
  $region15: #{hl_loop_forward.1} parent=0 // pred_check_branch
    %95 = sbr.rel (0) target = $region17
  $region16: #{hl_loop_forward.1} parent=0 // pred_region
    _
  $region17: #{hl_loop_forward.1} parent=0 // pred_fallthru
    _
  // Predicated region
  $region18: #{hl_loop_forward.1} parent=0 // pred_check
    _
  $region19: #{hl_loop_forward.1} parent=0 // pred_check_branch
    %97 = sbr.rel (0) target = $region21
  $region20: #{hl_loop_forward.1} parent=0 // pred_region
    _
  $region21: #{hl_loop_forward.1} parent=0 // pred_fallthru
    _

</llo_original>
